<compile_context>
chip_gen: v7x
topology: tpu7x:2x2x1
jax: 0.10.0
libtpu: 0.0.40
codegen_flags: <defaults>
</compile_context>

<pallas_src>
import math

import jax
import jax.numpy as jnp
from jax.experimental import pallas as pl
from jax.experimental.pallas import tpu as pltpu

N_HIDDEN = 8                        # number of 2->2 hidden blocks
N_PARAMS = 4 + N_HIDDEN * 6 + 3     # 55 scalars total


def _mlp_kernel(wb_ref, x_ref, o_ref):
    """wb_ref: SMEM f32[N_PARAMS]; x_ref/o_ref: VMEM f32[rows, TB] (batch on lanes)."""
    x = x_ref[...]

    def p(i):                       # scalar parameter load from SMEM
        return wb_ref[i]

    # input block: Linear(1 -> 2) + ReLU          (params: w00, w01, b0, b1)
    h0 = jnp.maximum(p(0) * x + p(2), 0.0)
    h1 = jnp.maximum(p(1) * x + p(3), 0.0)

    # 8 hidden blocks: Linear(2 -> 2) + ReLU      (params: w00,w01,w10,w11,b0,b1)
    off = 4
    for _ in range(N_HIDDEN):       # static unroll; ~6 VPU FMAs per layer per vreg
        n0 = jnp.maximum(p(off + 0) * h0 + p(off + 2) * h1 + p(off + 4), 0.0)
        n1 = jnp.maximum(p(off + 1) * h0 + p(off + 3) * h1 + p(off + 5), 0.0)
        h0, h1 = n0, n1
        off += 6

    # output block: Linear(2 -> 1) + ReLU         (params: w0, w1, b)
    o_ref[...] = jnp.maximum(p(off + 0) * h0 + p(off + 1) * h1 + p(off + 2), 0.0)


def pack_params(weights, biases):
    """Flatten the 10 layers' weights/biases into one f32[N_PARAMS] SMEM table.
    Done ONCE at init — hoisted out of the per-call path."""
    flat = []
    for w, b in zip(weights, biases):
        flat.append(jnp.ravel(w.astype(jnp.float32)))   # row-major: w[in, out]
        flat.append(jnp.ravel(b.astype(jnp.float32)))
    packed = jnp.concatenate(flat)
    assert packed.shape == (N_PARAMS,)
    return packed


def _choose_tile(cols):
    """Largest lane tile (multiple of 128) dividing `cols`, capped so the grid
    keeps >= 2 steps when possible (v7x dual TC) and tiles stay <= 2048."""
    assert cols % 128 == 0
    cap = min(2048, cols)
    if cols >= 256:
        cap = min(cap, cols // 2)
    tb, t = 128, 128
    while t <= cap:
        if cols % t == 0:
            tb = t
        t += 128
    return tb


def p1_forward(x, packed_params):
    """x: (N, 1).  packed_params: f32[N_PARAMS] from pack_params()."""
    n = x.shape[0]
    x_flat = x.astype(jnp.float32).reshape(-1)

    # Lay the batch out lane-dense: (rows, cols) with cols a multiple of 128.
    # Use 8 sublane rows too when the batch is big enough (8x VPU utilization).
    if n % (8 * 128) == 0:
        rows, n_pad = 8, n
    elif n % 128 == 0:
        rows, n_pad = 1, n
    else:
        rows = 1
        n_pad = ((n + 127) // 128) * 128
        x_flat = jnp.concatenate([x_flat, jnp.zeros((n_pad - n,), jnp.float32)])
    cols = n_pad // rows
    x2 = x_flat.reshape(rows, cols)

    tb = _choose_tile(cols)
    grid = (cols // tb,)

    out2 = pl.pallas_call(
        _mlp_kernel,
        out_shape=jax.ShapeDtypeStruct((rows, cols), jnp.float32),
        grid_spec=pltpu.PrefetchScalarGridSpec(
            num_scalar_prefetch=0,
            grid=grid,
            in_specs=[
                pl.BlockSpec(memory_space=pltpu.MemorySpace.SMEM),   # 55 scalars
                pl.BlockSpec((rows, tb), lambda i: (0, i)),           # x slab
            ],
            out_specs=pl.BlockSpec((rows, tb), lambda i: (0, i)),
        ),
        compiler_params=pltpu.CompilerParams(
            dimension_semantics=("parallel",)),
    )(packed_params, x2)

    return out2.reshape(-1)[:n].reshape(n, 1)


def _make_params(key):
    """Deterministic init mimicking nn.Linear default (U[-1/sqrt(fan_in), +1/sqrt(fan_in)])."""
    dims = [(1, 2)] + [(2, 2)] * N_HIDDEN + [(2, 1)]
    weights, biases = [], []
    for fi, fo in dims:
        key, kw, kb = jax.random.split(key, 3)
        bound = 1.0 / math.sqrt(fi)
        weights.append(jax.random.uniform(kw, (fi, fo), jnp.float32, -bound, bound))
        biases.append(jax.random.uniform(kb, (fo,), jnp.float32, -bound, bound))
    return weights, biases


def _reference(x, weights, biases):
    h = x.astype(jnp.float32)
    for w, b in zip(weights, biases):
        h = jnp.maximum(h @ w + b, 0.0)
    return h


if __name__ == "__main__":
    key = jax.random.PRNGKey(0)
    weights, biases = _make_params(key)
    packed = pack_params(weights, biases)   # once, outside the per-call path

    # small batch of samples over [-sqrt(7), sqrt(7)], shape (256, 1)
    n = 256
    x = jnp.linspace(-math.sqrt(7.0), math.sqrt(7.0), n, dtype=jnp.float32).reshape(n, 1)

    out = p1_forward(x, packed)
    out = jax.block_until_ready(out)

    ref = _reference(x, weights, biases)
    assert out.shape == (n, 1)
    assert jnp.allclose(out, ref, atol=1e-5, rtol=1e-5), "mismatch vs. pure-JAX reference"

    print("KERNEL_OK")
</pallas_src>

<mosaic_0001>
module attributes {stable_mosaic.version = 11 : i64} {
  func.func @_mlp_kernel(%arg0: i32, %arg1: memref<55xf32, #tpu.memory_space<smem>>, %arg2: memref<1x128xf32, #tpu.memory_space<vmem>>, %arg3: memref<1x128xf32, #tpu.memory_space<vmem>>) attributes {dimension_semantics = [#tpu.dimension_semantics<parallel>], iteration_bounds = array<i64: 2>, scalar_prefetch = 0 : i64, scratch_operands = 0 : i64, tpu.core_type = #tpu.core_type<tc>, window_params = [{transform_indices = @transform_0, window_bounds = array<i64: 55>}, {transform_indices = @transform_1, window_bounds = array<i64: 1, 128>}, {transform_indices = @transform_2, window_bounds = array<i64: 1, 128>}]} {
    %c0 = arith.constant 0 : index
    %c0_0 = arith.constant 0 : index
    %0 = vector.load %arg2[%c0, %c0_0] : memref<1x128xf32, #tpu.memory_space<vmem>>, vector<1x128xf32>
    %c0_1 = arith.constant 0 : index
    %1 = memref.load %arg1[%c0_1] : memref<55xf32, #tpu.memory_space<smem>>
    %2 = vector.broadcast %1 : f32 to vector<1x128xf32>
    %3 = arith.mulf %2, %0 : vector<1x128xf32>
    %c2 = arith.constant 2 : index
    %4 = memref.load %arg1[%c2] : memref<55xf32, #tpu.memory_space<smem>>
    %5 = vector.broadcast %4 : f32 to vector<1x128xf32>
    %6 = arith.addf %3, %5 : vector<1x128xf32>
    %cst = arith.constant 0.000000e+00 : f32
    %7 = vector.broadcast %cst : f32 to vector<1x128xf32>
    %8 = arith.maximumf %6, %7 : vector<1x128xf32>
    %c1 = arith.constant 1 : index
    %9 = memref.load %arg1[%c1] : memref<55xf32, #tpu.memory_space<smem>>
    %10 = vector.broadcast %9 : f32 to vector<1x128xf32>
    %11 = arith.mulf %10, %0 : vector<1x128xf32>
    %c3 = arith.constant 3 : index
    %12 = memref.load %arg1[%c3] : memref<55xf32, #tpu.memory_space<smem>>
    %13 = vector.broadcast %12 : f32 to vector<1x128xf32>
    %14 = arith.addf %11, %13 : vector<1x128xf32>
    %cst_2 = arith.constant 0.000000e+00 : f32
    %15 = vector.broadcast %cst_2 : f32 to vector<1x128xf32>
    %16 = arith.maximumf %14, %15 : vector<1x128xf32>
    %c4 = arith.constant 4 : index
    %17 = memref.load %arg1[%c4] : memref<55xf32, #tpu.memory_space<smem>>
    %18 = vector.broadcast %17 : f32 to vector<1x128xf32>
    %19 = arith.mulf %18, %8 : vector<1x128xf32>
    %c6 = arith.constant 6 : index
    %20 = memref.load %arg1[%c6] : memref<55xf32, #tpu.memory_space<smem>>
    %21 = vector.broadcast %20 : f32 to vector<1x128xf32>
    %22 = arith.mulf %21, %16 : vector<1x128xf32>
    %23 = arith.addf %19, %22 : vector<1x128xf32>
    %c8 = arith.constant 8 : index
    %24 = memref.load %arg1[%c8] : memref<55xf32, #tpu.memory_space<smem>>
    %25 = vector.broadcast %24 : f32 to vector<1x128xf32>
    %26 = arith.addf %23, %25 : vector<1x128xf32>
    %cst_3 = arith.constant 0.000000e+00 : f32
    %27 = vector.broadcast %cst_3 : f32 to vector<1x128xf32>
    %28 = arith.maximumf %26, %27 : vector<1x128xf32>
    %c5 = arith.constant 5 : index
    %29 = memref.load %arg1[%c5] : memref<55xf32, #tpu.memory_space<smem>>
    %30 = vector.broadcast %29 : f32 to vector<1x128xf32>
    %31 = arith.mulf %30, %8 : vector<1x128xf32>
    %c7 = arith.constant 7 : index
    %32 = memref.load %arg1[%c7] : memref<55xf32, #tpu.memory_space<smem>>
    %33 = vector.broadcast %32 : f32 to vector<1x128xf32>
    %34 = arith.mulf %33, %16 : vector<1x128xf32>
    %35 = arith.addf %31, %34 : vector<1x128xf32>
    %c9 = arith.constant 9 : index
    %36 = memref.load %arg1[%c9] : memref<55xf32, #tpu.memory_space<smem>>
    %37 = vector.broadcast %36 : f32 to vector<1x128xf32>
    %38 = arith.addf %35, %37 : vector<1x128xf32>
    %cst_4 = arith.constant 0.000000e+00 : f32
    %39 = vector.broadcast %cst_4 : f32 to vector<1x128xf32>
    %40 = arith.maximumf %38, %39 : vector<1x128xf32>
    %c10 = arith.constant 10 : index
    %41 = memref.load %arg1[%c10] : memref<55xf32, #tpu.memory_space<smem>>
    %42 = vector.broadcast %41 : f32 to vector<1x128xf32>
    %43 = arith.mulf %42, %28 : vector<1x128xf32>
    %c12 = arith.constant 12 : index
    %44 = memref.load %arg1[%c12] : memref<55xf32, #tpu.memory_space<smem>>
    %45 = vector.broadcast %44 : f32 to vector<1x128xf32>
    %46 = arith.mulf %45, %40 : vector<1x128xf32>
    %47 = arith.addf %43, %46 : vector<1x128xf32>
    %c14 = arith.constant 14 : index
    %48 = memref.load %arg1[%c14] : memref<55xf32, #tpu.memory_space<smem>>
    %49 = vector.broadcast %48 : f32 to vector<1x128xf32>
    %50 = arith.addf %47, %49 : vector<1x128xf32>
    %cst_5 = arith.constant 0.000000e+00 : f32
    %51 = vector.broadcast %cst_5 : f32 to vector<1x128xf32>
    %52 = arith.maximumf %50, %51 : vector<1x128xf32>
    %c11 = arith.constant 11 : index
    %53 = memref.load %arg1[%c11] : memref<55xf32, #tpu.memory_space<smem>>
    %54 = vector.broadcast %53 : f32 to vector<1x128xf32>
    %55 = arith.mulf %54, %28 : vector<1x128xf32>
    %c13 = arith.constant 13 : index
    %56 = memref.load %arg1[%c13] : memref<55xf32, #tpu.memory_space<smem>>
    %57 = vector.broadcast %56 : f32 to vector<1x128xf32>
    %58 = arith.mulf %57, %40 : vector<1x128xf32>
    %59 = arith.addf %55, %58 : vector<1x128xf32>
    %c15 = arith.constant 15 : index
    %60 = memref.load %arg1[%c15] : memref<55xf32, #tpu.memory_space<smem>>
    %61 = vector.broadcast %60 : f32 to vector<1x128xf32>
    %62 = arith.addf %59, %61 : vector<1x128xf32>
    %cst_6 = arith.constant 0.000000e+00 : f32
    %63 = vector.broadcast %cst_6 : f32 to vector<1x128xf32>
    %64 = arith.maximumf %62, %63 : vector<1x128xf32>
    %c16 = arith.constant 16 : index
    %65 = memref.load %arg1[%c16] : memref<55xf32, #tpu.memory_space<smem>>
    %66 = vector.broadcast %65 : f32 to vector<1x128xf32>
    %67 = arith.mulf %66, %52 : vector<1x128xf32>
    %c18 = arith.constant 18 : index
    %68 = memref.load %arg1[%c18] : memref<55xf32, #tpu.memory_space<smem>>
    %69 = vector.broadcast %68 : f32 to vector<1x128xf32>
    %70 = arith.mulf %69, %64 : vector<1x128xf32>
    %71 = arith.addf %67, %70 : vector<1x128xf32>
    %c20 = arith.constant 20 : index
    %72 = memref.load %arg1[%c20] : memref<55xf32, #tpu.memory_space<smem>>
    %73 = vector.broadcast %72 : f32 to vector<1x128xf32>
    %74 = arith.addf %71, %73 : vector<1x128xf32>
    %cst_7 = arith.constant 0.000000e+00 : f32
    %75 = vector.broadcast %cst_7 : f32 to vector<1x128xf32>
    %76 = arith.maximumf %74, %75 : vector<1x128xf32>
    %c17 = arith.constant 17 : index
    %77 = memref.load %arg1[%c17] : memref<55xf32, #tpu.memory_space<smem>>
    %78 = vector.broadcast %77 : f32 to vector<1x128xf32>
    %79 = arith.mulf %78, %52 : vector<1x128xf32>
    %c19 = arith.constant 19 : index
    %80 = memref.load %arg1[%c19] : memref<55xf32, #tpu.memory_space<smem>>
    %81 = vector.broadcast %80 : f32 to vector<1x128xf32>
    %82 = arith.mulf %81, %64 : vector<1x128xf32>
    %83 = arith.addf %79, %82 : vector<1x128xf32>
    %c21 = arith.constant 21 : index
    %84 = memref.load %arg1[%c21] : memref<55xf32, #tpu.memory_space<smem>>
    %85 = vector.broadcast %84 : f32 to vector<1x128xf32>
    %86 = arith.addf %83, %85 : vector<1x128xf32>
    %cst_8 = arith.constant 0.000000e+00 : f32
    %87 = vector.broadcast %cst_8 : f32 to vector<1x128xf32>
    %88 = arith.maximumf %86, %87 : vector<1x128xf32>
    %c22 = arith.constant 22 : index
    %89 = memref.load %arg1[%c22] : memref<55xf32, #tpu.memory_space<smem>>
    %90 = vector.broadcast %89 : f32 to vector<1x128xf32>
    %91 = arith.mulf %90, %76 : vector<1x128xf32>
    %c24 = arith.constant 24 : index
    %92 = memref.load %arg1[%c24] : memref<55xf32, #tpu.memory_space<smem>>
    %93 = vector.broadcast %92 : f32 to vector<1x128xf32>
    %94 = arith.mulf %93, %88 : vector<1x128xf32>
    %95 = arith.addf %91, %94 : vector<1x128xf32>
    %c26 = arith.constant 26 : index
    %96 = memref.load %arg1[%c26] : memref<55xf32, #tpu.memory_space<smem>>
    %97 = vector.broadcast %96 : f32 to vector<1x128xf32>
    %98 = arith.addf %95, %97 : vector<1x128xf32>
    %cst_9 = arith.constant 0.000000e+00 : f32
    %99 = vector.broadcast %cst_9 : f32 to vector<1x128xf32>
    %100 = arith.maximumf %98, %99 : vector<1x128xf32>
    %c23 = arith.constant 23 : index
    %101 = memref.load %arg1[%c23] : memref<55xf32, #tpu.memory_space<smem>>
    %102 = vector.broadcast %101 : f32 to vector<1x128xf32>
    %103 = arith.mulf %102, %76 : vector<1x128xf32>
    %c25 = arith.constant 25 : index
    %104 = memref.load %arg1[%c25] : memref<55xf32, #tpu.memory_space<smem>>
    %105 = vector.broadcast %104 : f32 to vector<1x128xf32>
    %106 = arith.mulf %105, %88 : vector<1x128xf32>
    %107 = arith.addf %103, %106 : vector<1x128xf32>
    %c27 = arith.constant 27 : index
    %108 = memref.load %arg1[%c27] : memref<55xf32, #tpu.memory_space<smem>>
    %109 = vector.broadcast %108 : f32 to vector<1x128xf32>
    %110 = arith.addf %107, %109 : vector<1x128xf32>
    %cst_10 = arith.constant 0.000000e+00 : f32
    %111 = vector.broadcast %cst_10 : f32 to vector<1x128xf32>
    %112 = arith.maximumf %110, %111 : vector<1x128xf32>
    %c28 = arith.constant 28 : index
    %113 = memref.load %arg1[%c28] : memref<55xf32, #tpu.memory_space<smem>>
    %114 = vector.broadcast %113 : f32 to vector<1x128xf32>
    %115 = arith.mulf %114, %100 : vector<1x128xf32>
    %c30 = arith.constant 30 : index
    %116 = memref.load %arg1[%c30] : memref<55xf32, #tpu.memory_space<smem>>
    %117 = vector.broadcast %116 : f32 to vector<1x128xf32>
    %118 = arith.mulf %117, %112 : vector<1x128xf32>
    %119 = arith.addf %115, %118 : vector<1x128xf32>
    %c32 = arith.constant 32 : index
    %120 = memref.load %arg1[%c32] : memref<55xf32, #tpu.memory_space<smem>>
    %121 = vector.broadcast %120 : f32 to vector<1x128xf32>
    %122 = arith.addf %119, %121 : vector<1x128xf32>
    %cst_11 = arith.constant 0.000000e+00 : f32
    %123 = vector.broadcast %cst_11 : f32 to vector<1x128xf32>
    %124 = arith.maximumf %122, %123 : vector<1x128xf32>
    %c29 = arith.constant 29 : index
    %125 = memref.load %arg1[%c29] : memref<55xf32, #tpu.memory_space<smem>>
    %126 = vector.broadcast %125 : f32 to vector<1x128xf32>
    %127 = arith.mulf %126, %100 : vector<1x128xf32>
    %c31 = arith.constant 31 : index
    %128 = memref.load %arg1[%c31] : memref<55xf32, #tpu.memory_space<smem>>
    %129 = vector.broadcast %128 : f32 to vector<1x128xf32>
    %130 = arith.mulf %129, %112 : vector<1x128xf32>
    %131 = arith.addf %127, %130 : vector<1x128xf32>
    %c33 = arith.constant 33 : index
    %132 = memref.load %arg1[%c33] : memref<55xf32, #tpu.memory_space<smem>>
    %133 = vector.broadcast %132 : f32 to vector<1x128xf32>
    %134 = arith.addf %131, %133 : vector<1x128xf32>
    %cst_12 = arith.constant 0.000000e+00 : f32
    %135 = vector.broadcast %cst_12 : f32 to vector<1x128xf32>
    %136 = arith.maximumf %134, %135 : vector<1x128xf32>
    %c34 = arith.constant 34 : index
    %137 = memref.load %arg1[%c34] : memref<55xf32, #tpu.memory_space<smem>>
    %138 = vector.broadcast %137 : f32 to vector<1x128xf32>
    %139 = arith.mulf %138, %124 : vector<1x128xf32>
    %c36 = arith.constant 36 : index
    %140 = memref.load %arg1[%c36] : memref<55xf32, #tpu.memory_space<smem>>
    %141 = vector.broadcast %140 : f32 to vector<1x128xf32>
    %142 = arith.mulf %141, %136 : vector<1x128xf32>
    %143 = arith.addf %139, %142 : vector<1x128xf32>
    %c38 = arith.constant 38 : index
    %144 = memref.load %arg1[%c38] : memref<55xf32, #tpu.memory_space<smem>>
    %145 = vector.broadcast %144 : f32 to vector<1x128xf32>
    %146 = arith.addf %143, %145 : vector<1x128xf32>
    %cst_13 = arith.constant 0.000000e+00 : f32
    %147 = vector.broadcast %cst_13 : f32 to vector<1x128xf32>
    %148 = arith.maximumf %146, %147 : vector<1x128xf32>
    %c35 = arith.constant 35 : index
    %149 = memref.load %arg1[%c35] : memref<55xf32, #tpu.memory_space<smem>>
    %150 = vector.broadcast %149 : f32 to vector<1x128xf32>
    %151 = arith.mulf %150, %124 : vector<1x128xf32>
    %c37 = arith.constant 37 : index
    %152 = memref.load %arg1[%c37] : memref<55xf32, #tpu.memory_space<smem>>
    %153 = vector.broadcast %152 : f32 to vector<1x128xf32>
    %154 = arith.mulf %153, %136 : vector<1x128xf32>
    %155 = arith.addf %151, %154 : vector<1x128xf32>
    %c39 = arith.constant 39 : index
    %156 = memref.load %arg1[%c39] : memref<55xf32, #tpu.memory_space<smem>>
    %157 = vector.broadcast %156 : f32 to vector<1x128xf32>
    %158 = arith.addf %155, %157 : vector<1x128xf32>
    %cst_14 = arith.constant 0.000000e+00 : f32
    %159 = vector.broadcast %cst_14 : f32 to vector<1x128xf32>
    %160 = arith.maximumf %158, %159 : vector<1x128xf32>
    %c40 = arith.constant 40 : index
    %161 = memref.load %arg1[%c40] : memref<55xf32, #tpu.memory_space<smem>>
    %162 = vector.broadcast %161 : f32 to vector<1x128xf32>
    %163 = arith.mulf %162, %148 : vector<1x128xf32>
    %c42 = arith.constant 42 : index
    %164 = memref.load %arg1[%c42] : memref<55xf32, #tpu.memory_space<smem>>
    %165 = vector.broadcast %164 : f32 to vector<1x128xf32>
    %166 = arith.mulf %165, %160 : vector<1x128xf32>
    %167 = arith.addf %163, %166 : vector<1x128xf32>
    %c44 = arith.constant 44 : index
    %168 = memref.load %arg1[%c44] : memref<55xf32, #tpu.memory_space<smem>>
    %169 = vector.broadcast %168 : f32 to vector<1x128xf32>
    %170 = arith.addf %167, %169 : vector<1x128xf32>
    %cst_15 = arith.constant 0.000000e+00 : f32
    %171 = vector.broadcast %cst_15 : f32 to vector<1x128xf32>
    %172 = arith.maximumf %170, %171 : vector<1x128xf32>
    %c41 = arith.constant 41 : index
    %173 = memref.load %arg1[%c41] : memref<55xf32, #tpu.memory_space<smem>>
    %174 = vector.broadcast %173 : f32 to vector<1x128xf32>
    %175 = arith.mulf %174, %148 : vector<1x128xf32>
    %c43 = arith.constant 43 : index
    %176 = memref.load %arg1[%c43] : memref<55xf32, #tpu.memory_space<smem>>
    %177 = vector.broadcast %176 : f32 to vector<1x128xf32>
    %178 = arith.mulf %177, %160 : vector<1x128xf32>
    %179 = arith.addf %175, %178 : vector<1x128xf32>
    %c45 = arith.constant 45 : index
    %180 = memref.load %arg1[%c45] : memref<55xf32, #tpu.memory_space<smem>>
    %181 = vector.broadcast %180 : f32 to vector<1x128xf32>
    %182 = arith.addf %179, %181 : vector<1x128xf32>
    %cst_16 = arith.constant 0.000000e+00 : f32
    %183 = vector.broadcast %cst_16 : f32 to vector<1x128xf32>
    %184 = arith.maximumf %182, %183 : vector<1x128xf32>
    %c46 = arith.constant 46 : index
    %185 = memref.load %arg1[%c46] : memref<55xf32, #tpu.memory_space<smem>>
    %186 = vector.broadcast %185 : f32 to vector<1x128xf32>
    %187 = arith.mulf %186, %172 : vector<1x128xf32>
    %c48 = arith.constant 48 : index
    %188 = memref.load %arg1[%c48] : memref<55xf32, #tpu.memory_space<smem>>
    %189 = vector.broadcast %188 : f32 to vector<1x128xf32>
    %190 = arith.mulf %189, %184 : vector<1x128xf32>
    %191 = arith.addf %187, %190 : vector<1x128xf32>
    %c50 = arith.constant 50 : index
    %192 = memref.load %arg1[%c50] : memref<55xf32, #tpu.memory_space<smem>>
    %193 = vector.broadcast %192 : f32 to vector<1x128xf32>
    %194 = arith.addf %191, %193 : vector<1x128xf32>
    %cst_17 = arith.constant 0.000000e+00 : f32
    %195 = vector.broadcast %cst_17 : f32 to vector<1x128xf32>
    %196 = arith.maximumf %194, %195 : vector<1x128xf32>
    %c47 = arith.constant 47 : index
    %197 = memref.load %arg1[%c47] : memref<55xf32, #tpu.memory_space<smem>>
    %198 = vector.broadcast %197 : f32 to vector<1x128xf32>
    %199 = arith.mulf %198, %172 : vector<1x128xf32>
    %c49 = arith.constant 49 : index
    %200 = memref.load %arg1[%c49] : memref<55xf32, #tpu.memory_space<smem>>
    %201 = vector.broadcast %200 : f32 to vector<1x128xf32>
    %202 = arith.mulf %201, %184 : vector<1x128xf32>
    %203 = arith.addf %199, %202 : vector<1x128xf32>
    %c51 = arith.constant 51 : index
    %204 = memref.load %arg1[%c51] : memref<55xf32, #tpu.memory_space<smem>>
    %205 = vector.broadcast %204 : f32 to vector<1x128xf32>
    %206 = arith.addf %203, %205 : vector<1x128xf32>
    %cst_18 = arith.constant 0.000000e+00 : f32
    %207 = vector.broadcast %cst_18 : f32 to vector<1x128xf32>
    %208 = arith.maximumf %206, %207 : vector<1x128xf32>
    %c52 = arith.constant 52 : index
    %209 = memref.load %arg1[%c52] : memref<55xf32, #tpu.memory_space<smem>>
    %210 = vector.broadcast %209 : f32 to vector<1x128xf32>
    %211 = arith.mulf %210, %196 : vector<1x128xf32>
    %c53 = arith.constant 53 : index
    %212 = memref.load %arg1[%c53] : memref<55xf32, #tpu.memory_space<smem>>
    %213 = vector.broadcast %212 : f32 to vector<1x128xf32>
    %214 = arith.mulf %213, %208 : vector<1x128xf32>
    %215 = arith.addf %211, %214 : vector<1x128xf32>
    %c54 = arith.constant 54 : index
    %216 = memref.load %arg1[%c54] : memref<55xf32, #tpu.memory_space<smem>>
    %217 = vector.broadcast %216 : f32 to vector<1x128xf32>
    %218 = arith.addf %215, %217 : vector<1x128xf32>
    %cst_19 = arith.constant 0.000000e+00 : f32
    %219 = vector.broadcast %cst_19 : f32 to vector<1x128xf32>
    %220 = arith.maximumf %218, %219 : vector<1x128xf32>
    %c0_20 = arith.constant 0 : index
    %c0_21 = arith.constant 0 : index
    %221 = vector.load %arg3[%c0_20, %c0_21] : memref<1x128xf32, #tpu.memory_space<vmem>>, vector<1x128xf32>
    tpu.vector_store %arg3[%c0_20, %c0_21], %220 {strides = array<i32>} : memref<1x128xf32, #tpu.memory_space<vmem>>, vector<1x128xf32>,
    return
  }
  func.func @transform_0(%arg0: i32) -> i32 {
    %c0_i32 = arith.constant 0 : i32
    %c0_i32_0 = arith.constant 0 : i32
    return %c0_i32 : i32
  }
  func.func @transform_1(%arg0: i32) -> (i32, i32) {
    %c0_i32 = arith.constant 0 : i32
    %c0_i32_0 = arith.constant 0 : i32
    return %c0_i32, %arg0 : i32, i32
  }
  func.func @transform_2(%arg0: i32) -> (i32, i32) {
    %c0_i32 = arith.constant 0 : i32
    %c0_i32_0 = arith.constant 0 : i32
    return %c0_i32, %arg0 : i32, i32
  }
}

</mosaic_0001>

<llo_original>
// kernel: tpu_custom_call.1
$region0: #{tpu_custom_call.1}
  #allocation0 [shape = 'u32[]', space=smem, size = 0x4, offset = 0x4, fixed_abs, tag = 'smem constant byte address 0x4 - core index']
  #allocation1 [shape = 'u32[144,128]{1,0:T(1,128)}', space=vmem, size = 0x12000, scoped, tag = 'internal scratch']
  %s0 = inlined_call_operand.hbm [shape: f32[55], index: 0, kind: input, shape index: {}]
  %s1 = inlined_call_operand.vmem [shape: f32[1,256], index: 1, kind: input, shape index: {}]
  %s2 = inlined_call_operand.hbm [shape: f32[1,256], index: 2, kind: output, shape index: {}]
  %s3 = sld [smem:[#allocation0]]
  $region45: #{tpu_custom_call.1} parent=0
    _
  %s5 = ssub.s32 1, %s3
  %s6 = scalar_select 0, %s5, %s3
  $region1: #{tpu_custom_call.1} parent=0
    #allocation2 [shape = 'u8[512]{0}', space=smem, size = 0x200, scoped, tag = 'input window, operand 0, single buffered']
    #allocation3 [shape = 's32[2]{0}', space=sflag, size = 0x8, scoped, tag = 'scoped memory for tpu_custom_call.1']
    #allocation4 [shape = 's32[2]{0}', space=sflag, size = 0x8, scoped, tag = 'scoped memory for tpu_custom_call.1']
    #allocation5 [shape = 'u8[1024]{0}', space=vmem, size = 0x400, scoped, tag = 'output window, operand 0']
    %7 = vsyncpa [#allocation4], 0
    %8 = vsyncpa [#allocation3], 0
    %s9 = scalar_lea.sflag [#allocation3], 1
    %10 = vsyncpa %s9, 0
    loop: start=0, step=1, limit=4
    $region2: #{tpu_custom_call.1} parent=1 // loop_pre_header
      _
    $region3: #{tpu_custom_call.1} parent=1 // loop_header
      %s12 = sphi 0, %s16
      %p13 = scmp.ge.s32.totalorder %s12, 4
      %s20 = sphi 0, %s20
      %s22 = sphi 0, %s20
      %s23 = sphi 0, %s22
      %s37 = sphi 0, %s23
      %s43 = sphi 0, %s45
      %s46 = sphi 0, %s43
      %s47 = sphi 0, %s46
      %s63 = sphi 0, %s47
      %s69 = sphi 0, %s71
      %s72 = sphi 0, %s69
      %s73 = sphi 0, %s72
      %s89 = sphi 0, %s73
    $region4: #{tpu_custom_call.1} parent=1 // loop_header_branch
      %15 = sbr.rel (%p13) target = $region8
    $region5: #{tpu_custom_call.1} parent=1 // loop_body
      %s17 = ssub.s32 %s12, 1
      %s18 = ssub.s32 %s12, 2
      %s19 = sadd.s32 %s12, 1
      %s21 = sadd.s32 %s20, 1
      %p24 = scmp.eq.s32.totalorder %s12, 1
      %p25 = scmp.ne.s32.totalorder %s20, %s22
      %p26 = scmp.eq.s32.totalorder %s12, 0
      %p27 = por %p25, %p26
      %p28 = scmp.ne.s32.totalorder %s20, %s22
      %p29 = scmp.eq.s32.totalorder %s17, 1
      %p30 = por %p28, %p29
      %p31 = scmp.ne.s32.totalorder %s22, %s23
      %p32 = scmp.eq.s32.totalorder %s17, 0
      %p33 = por %p31, %p32
      %p34 = scmp.ne.s32.totalorder %s22, %s23
      %p35 = scmp.eq.s32.totalorder %s18, 1
      %p36 = por %p34, %p35
      %p38 = scmp.ne.s32.totalorder %s23, %s37
      %p39 = scmp.eq.s32.totalorder %s18, 0
      %p40 = por %p38, %p39
      %s41 = ssub.s32 %s12, %s19
      %p42 = scmp.eq.s32.totalorder %s41, 0
      %s44 = sadd.s32 %s43, 1
      %s45 = scalar_select %p42, %s43, %s44
      %p48 = pneg %p42
      %p49 = scmp.eq.s32.totalorder %s12, 1
      %p50 = por %p48, %p49
      %p51 = scmp.ne.s32.totalorder %s43, %s46
      %p52 = scmp.eq.s32.totalorder %s12, 0
      %p53 = por %p51, %p52
      %p54 = scmp.ne.s32.totalorder %s43, %s46
      %p55 = scmp.eq.s32.totalorder %s17, 1
      %p56 = por %p54, %p55
      %p57 = scmp.ne.s32.totalorder %s46, %s47
      %p58 = scmp.eq.s32.totalorder %s17, 0
      %p59 = por %p57, %p58
      %p60 = scmp.ne.s32.totalorder %s46, %s47
      %p61 = scmp.eq.s32.totalorder %s18, 1
      %p62 = por %p60, %p61
      %p64 = scmp.ne.s32.totalorder %s47, %s63
      %p65 = scmp.eq.s32.totalorder %s18, 0
      %p66 = por %p64, %p65
      %s67 = ssub.s32 %s12, %s19
      %p68 = scmp.eq.s32.totalorder %s67, 0
      %s70 = sadd.s32 %s69, 1
      %s71 = scalar_select %p68, %s69, %s70
      %p74 = pneg %p68
      %p75 = scmp.eq.s32.totalorder %s12, 1
      %p76 = por %p74, %p75
      %p77 = scmp.ne.s32.totalorder %s69, %s72
      %p78 = scmp.eq.s32.totalorder %s12, 0
      %p79 = por %p77, %p78
      %p80 = scmp.ne.s32.totalorder %s69, %s72
      %p81 = scmp.eq.s32.totalorder %s17, 1
      %p82 = por %p80, %p81
      %p83 = scmp.ne.s32.totalorder %s72, %s73
      %p84 = scmp.eq.s32.totalorder %s17, 0
      %p85 = por %p83, %p84
      %p86 = scmp.ne.s32.totalorder %s72, %s73
      %p87 = scmp.eq.s32.totalorder %s18, 1
      %p88 = por %p86, %p87
      %p90 = scmp.ne.s32.totalorder %s73, %s89
      %p91 = scmp.eq.s32.totalorder %s18, 0
      %p92 = por %p90, %p91
      %p93 = scmp.le.s32.totalorder 1, %s12
      %p94 = scmp.lt.s32.totalorder %s12, 3
      %p95 = pnand %p93, %p94
      %p96 = pneg %p95
      // Predicated region
      $region9: #{tpu_custom_call.1} parent=5 // pred_check
        _
      $region10: #{tpu_custom_call.1} parent=5 // pred_check_branch
        %98 = sbr.rel (%p95) target = $region12
      $region11: #{tpu_custom_call.1} parent=5 // pred_region
        %s99 = ssub.s32 %s12, 1
        // Predicated region
        $region13: #{tpu_custom_call.1} parent=11 // pred_check
          %p100 = pneg %p33
        $region14: #{tpu_custom_call.1} parent=11 // pred_check_branch
          %102 = sbr.rel (%p100) target = $region16
        $region15: #{tpu_custom_call.1} parent=11 // pred_region
          %s104 = ssub.s32 16, 16
          %105 = vsyncadd [#allocation4], %s104
          %108 = dma.hbm_to_smem %s0, 16, [#allocation2], [#allocation4]
        $region16: #{tpu_custom_call.1} parent=11 // pred_fallthru
          _
      $region12: #{tpu_custom_call.1} parent=5 // pred_fallthru
        _
      %p109 = scmp.lt.s32.totalorder %s12, 2
      // Predicated region
      $region17: #{tpu_custom_call.1} parent=5 // pred_check
        %p110 = pneg %p109
      $region18: #{tpu_custom_call.1} parent=5 // pred_check_branch
        %112 = sbr.rel (%p110) target = $region20
      $region19: #{tpu_custom_call.1} parent=5 // pred_region
        // Predicated region
        $region21: #{tpu_custom_call.1} parent=19 // pred_check
          %p113 = pneg %p53
        $region22: #{tpu_custom_call.1} parent=19 // pred_check_branch
          %115 = sbr.rel (%p113) target = $region24
        $region23: #{tpu_custom_call.1} parent=19 // pred_region
          %p116 = scmp.lt.s32.totalorder %s12, 1
          %s117 = scalar_select %p116, %s12, 1
          %s118 = scalar_lea.vmem %s1, %s117
        $region24: #{tpu_custom_call.1} parent=19 // pred_fallthru
          _
      $region20: #{tpu_custom_call.1} parent=5 // pred_fallthru
        _
      %p119 = scmp.le.s32.totalorder 1, %s12
      %p120 = scmp.lt.s32.totalorder %s12, 3
      %p121 = pnand %p119, %p120
      %p122 = pneg %p121
      // Predicated region
      $region25: #{tpu_custom_call.1} parent=5 // pred_check
        _
      $region26: #{tpu_custom_call.1} parent=5 // pred_check_branch
        %124 = sbr.rel (%p121) target = $region28
      $region27: #{tpu_custom_call.1} parent=5 // pred_region
        %s125 = ssub.s32 %s12, 1
        // Predicated region
        $region29: #{tpu_custom_call.1} parent=27 // pred_check
          %p126 = pneg %p33
        $region30: #{tpu_custom_call.1} parent=27 // pred_check_branch
          %128 = sbr.rel (%p126) target = $region32
        $region31: #{tpu_custom_call.1} parent=27 // pred_region
          %129 = dma.done [#allocation4], 16
        $region32: #{tpu_custom_call.1} parent=27 // pred_fallthru
          _
        %130 = sfence
        %p131 = pneg %p33
        %p132 = pneg %p30
        %p133 = scmp.lt.s32.totalorder %s17, 1
        %s134 = scalar_select %p133, %s17, 1
        %s135 = scalar_lea.vmem %s1, %s134
        %p136 = pneg %p59
        %p137 = pneg %p56
        %p138 = pneg %p85
        %p139 = pneg %p82
        %s140 = sand.u32 %s72, 1
        %s141 = scalar_lea.sflag [#allocation3], %s140
        %s142 = sand.u32 %s72, 1
        %s143 = scalar_lea.vmem [#allocation5], %s142
        %p144 = scmp.lt.s32.totalorder %s17, 1
        %s145 = scalar_select %p144, %s17, 1
        %s146 = scalar_lea.vmem %s1, %s145
        %v147 = vld [vmem:[%s146] sm:$0x1]
        %s148 = sld [smem:[#allocation2]]
        %v149 = vstv %s148
        %v150 = vmul.f32 %v149, %v147
        %s151 = sld [smem:[#allocation2 + $0x2]]
        %v152 = vstv %s151
        %v153 = vadd.f32 %v150, %v152
        %v154 = vmax.f32 %v153, 0.0
        %s155 = sld [smem:[#allocation2 + $0x1]]
        %v156 = vstv %s155
        %v157 = vmul.f32 %v156, %v147
        %s158 = sld [smem:[#allocation2 + $0x3]]
        %v159 = vstv %s158
        %v160 = vadd.f32 %v157, %v159
        %v161 = vmax.f32 %v160, 0.0
        %s162 = sld [smem:[#allocation2 + $0x4]]
        %v163 = vstv %s162
        %v164 = vmul.f32 %v163, %v154
        %s165 = sld [smem:[#allocation2 + $0x6]]
        %v166 = vstv %s165
        %v167 = vmul.f32 %v166, %v161
        %v168 = vadd.f32 %v164, %v167
        %s169 = sld [smem:[#allocation2 + $0x8]]
        %v170 = vstv %s169
        %v171 = vadd.f32 %v168, %v170
        %v172 = vmax.f32 %v171, 0.0
        %s173 = sld [smem:[#allocation2 + $0x5]]
        %v174 = vstv %s173
        %v175 = vmul.f32 %v174, %v154
        %s176 = sld [smem:[#allocation2 + $0x7]]
        %v177 = vstv %s176
        %v178 = vmul.f32 %v177, %v161
        %v179 = vadd.f32 %v175, %v178
        %s180 = sld [smem:[#allocation2 + $0x9]]
        %v181 = vstv %s180
        %v182 = vadd.f32 %v179, %v181
        %v183 = vmax.f32 %v182, 0.0
        %s184 = sld [smem:[#allocation2 + $0xa]]
        %v185 = vstv %s184
        %v186 = vmul.f32 %v185, %v172
        %s187 = sld [smem:[#allocation2 + $0xc]]
        %v188 = vstv %s187
        %v189 = vmul.f32 %v188, %v183
        %v190 = vadd.f32 %v186, %v189
        %s191 = sld [smem:[#allocation2 + $0xe]]
        %v192 = vstv %s191
        %v193 = vadd.f32 %v190, %v192
        %v194 = vmax.f32 %v193, 0.0
        %s195 = sld [smem:[#allocation2 + $0xb]]
        %v196 = vstv %s195
        %v197 = vmul.f32 %v196, %v172
        %s198 = sld [smem:[#allocation2 + $0xd]]
        %v199 = vstv %s198
        %v200 = vmul.f32 %v199, %v183
        %v201 = vadd.f32 %v197, %v200
        %s202 = sld [smem:[#allocation2 + $0xf]]
        %v203 = vstv %s202
        %v204 = vadd.f32 %v201, %v203
        %v205 = vmax.f32 %v204, 0.0
        %s206 = sld [smem:[#allocation2 + $0x10]]
        %v207 = vstv %s206
        %v208 = vmul.f32 %v207, %v194
        %s209 = sld [smem:[#allocation2 + $0x12]]
        %v210 = vstv %s209
        %v211 = vmul.f32 %v210, %v205
        %v212 = vadd.f32 %v208, %v211
        %s213 = sld [smem:[#allocation2 + $0x14]]
        %v214 = vstv %s213
        %v215 = vadd.f32 %v212, %v214
        %v216 = vmax.f32 %v215, 0.0
        %s217 = sld [smem:[#allocation2 + $0x11]]
        %v218 = vstv %s217
        %v219 = vmul.f32 %v218, %v194
        %s220 = sld [smem:[#allocation2 + $0x13]]
        %v221 = vstv %s220
        %v222 = vmul.f32 %v221, %v205
        %v223 = vadd.f32 %v219, %v222
        %s224 = sld [smem:[#allocation2 + $0x15]]
        %v225 = vstv %s224
        %v226 = vadd.f32 %v223, %v225
        %v227 = vmax.f32 %v226, 0.0
        %s228 = sld [smem:[#allocation2 + $0x16]]
        %v229 = vstv %s228
        %v230 = vmul.f32 %v229, %v216
        %s231 = sld [smem:[#allocation2 + $0x18]]
        %v232 = vstv %s231
        %v233 = vmul.f32 %v232, %v227
        %v234 = vadd.f32 %v230, %v233
        %s235 = sld [smem:[#allocation2 + $0x1a]]
        %v236 = vstv %s235
        %v237 = vadd.f32 %v234, %v236
        %v238 = vmax.f32 %v237, 0.0
        %s239 = sld [smem:[#allocation2 + $0x17]]
        %v240 = vstv %s239
        %v241 = vmul.f32 %v240, %v216
        %s242 = sld [smem:[#allocation2 + $0x19]]
        %v243 = vstv %s242
        %v244 = vmul.f32 %v243, %v227
        %v245 = vadd.f32 %v241, %v244
        %s246 = sld [smem:[#allocation2 + $0x1b]]
        %v247 = vstv %s246
        %v248 = vadd.f32 %v245, %v247
        %v249 = vmax.f32 %v248, 0.0
        %s250 = sld [smem:[#allocation2 + $0x1c]]
        %v251 = vstv %s250
        %v252 = vmul.f32 %v251, %v238
        %s253 = sld [smem:[#allocation2 + $0x1e]]
        %v254 = vstv %s253
        %v255 = vmul.f32 %v254, %v249
        %v256 = vadd.f32 %v252, %v255
        %s257 = sld [smem:[#allocation2 + $0x20]]
        %v258 = vstv %s257
        %v259 = vadd.f32 %v256, %v258
        %v260 = vmax.f32 %v259, 0.0
        %s261 = sld [smem:[#allocation2 + $0x1d]]
        %v262 = vstv %s261
        %v263 = vmul.f32 %v262, %v238
        %s264 = sld [smem:[#allocation2 + $0x1f]]
        %v265 = vstv %s264
        %v266 = vmul.f32 %v265, %v249
        %v267 = vadd.f32 %v263, %v266
        %s268 = sld [smem:[#allocation2 + $0x21]]
        %v269 = vstv %s268
        %v270 = vadd.f32 %v267, %v269
        %v271 = vmax.f32 %v270, 0.0
        %s272 = sld [smem:[#allocation2 + $0x22]]
        %v273 = vstv %s272
        %v274 = vmul.f32 %v273, %v260
        %s275 = sld [smem:[#allocation2 + $0x24]]
        %v276 = vstv %s275
        %v277 = vmul.f32 %v276, %v271
        %v278 = vadd.f32 %v274, %v277
        %s279 = sld [smem:[#allocation2 + $0x26]]
        %v280 = vstv %s279
        %v281 = vadd.f32 %v278, %v280
        %v282 = vmax.f32 %v281, 0.0
        %s283 = sld [smem:[#allocation2 + $0x23]]
        %v284 = vstv %s283
        %v285 = vmul.f32 %v284, %v260
        %s286 = sld [smem:[#allocation2 + $0x25]]
        %v287 = vstv %s286
        %v288 = vmul.f32 %v287, %v271
        %v289 = vadd.f32 %v285, %v288
        %s290 = sld [smem:[#allocation2 + $0x27]]
        %v291 = vstv %s290
        %v292 = vadd.f32 %v289, %v291
        %v293 = vmax.f32 %v292, 0.0
        %s294 = sld [smem:[#allocation2 + $0x28]]
        %v295 = vstv %s294
        %v296 = vmul.f32 %v295, %v282
        %s297 = sld [smem:[#allocation2 + $0x2a]]
        %v298 = vstv %s297
        %v299 = vmul.f32 %v298, %v293
        %v300 = vadd.f32 %v296, %v299
        %s301 = sld [smem:[#allocation2 + $0x2c]]
        %v302 = vstv %s301
        %v303 = vadd.f32 %v300, %v302
        %v304 = vmax.f32 %v303, 0.0
        %s305 = sld [smem:[#allocation2 + $0x29]]
        %v306 = vstv %s305
        %v307 = vmul.f32 %v306, %v282
        %s308 = sld [smem:[#allocation2 + $0x2b]]
        %v309 = vstv %s308
        %v310 = vmul.f32 %v309, %v293
        %v311 = vadd.f32 %v307, %v310
        %s312 = sld [smem:[#allocation2 + $0x2d]]
        %v313 = vstv %s312
        %v314 = vadd.f32 %v311, %v313
        %v315 = vmax.f32 %v314, 0.0
        %s316 = sld [smem:[#allocation2 + $0x2e]]
        %v317 = vstv %s316
        %v318 = vmul.f32 %v317, %v304
        %s319 = sld [smem:[#allocation2 + $0x30]]
        %v320 = vstv %s319
        %v321 = vmul.f32 %v320, %v315
        %v322 = vadd.f32 %v318, %v321
        %s323 = sld [smem:[#allocation2 + $0x32]]
        %v324 = vstv %s323
        %v325 = vadd.f32 %v322, %v324
        %v326 = vmax.f32 %v325, 0.0
        %s327 = sld [smem:[#allocation2 + $0x2f]]
        %v328 = vstv %s327
        %v329 = vmul.f32 %v328, %v304
        %s330 = sld [smem:[#allocation2 + $0x31]]
        %v331 = vstv %s330
        %v332 = vmul.f32 %v331, %v315
        %v333 = vadd.f32 %v329, %v332
        %s334 = sld [smem:[#allocation2 + $0x33]]
        %v335 = vstv %s334
        %v336 = vadd.f32 %v333, %v335
        %v337 = vmax.f32 %v336, 0.0
        %s338 = sld [smem:[#allocation2 + $0x34]]
        %v339 = vstv %s338
        %v340 = vmul.f32 %v339, %v326
        %s341 = sld [smem:[#allocation2 + $0x35]]
        %v342 = vstv %s341
        %v343 = vmul.f32 %v342, %v337
        %v344 = vadd.f32 %v340, %v343
        %s345 = sld [smem:[#allocation2 + $0x36]]
        %v346 = vstv %s345
        %v347 = vadd.f32 %v344, %v346
        %v348 = vmax.f32 %v347, 0.0
        %349 = vst [vmem:[%s143] sm:$0x1] %v348
        %s350 = sand.u32 %s72, 1
        %s351 = scalar_lea.sflag [#allocation3], %s350
        %s352 = sand.u32 %s72, 1
        %s353 = scalar_lea.vmem [#allocation5], %s352
        // Predicated region
        $region33: #{tpu_custom_call.1} parent=27 // pred_check
          %p354 = pneg %p82
        $region34: #{tpu_custom_call.1} parent=27 // pred_check_branch
          %356 = sbr.rel (%p354) target = $region36
        $region35: #{tpu_custom_call.1} parent=27 // pred_region
          %s358 = ssub.s32 16, 16
          %359 = vsyncadd %s351, %s358
          %s360 = smul.addr %s17, 16
          %s361 = scalar_lea.hbm %s2, %s360
          %s363 = sshll.u32 %s353, 4
          %s364 = int_to_ptr.vmem [resolvable:$true] %s363
          %366 = dma.vmem_to_hbm [thread:$0]  %s364, 16, %s361, %s351
        $region36: #{tpu_custom_call.1} parent=27 // pred_fallthru
          _
      $region28: #{tpu_custom_call.1} parent=5 // pred_fallthru
        _
      %p367 = scmp.le.s32.totalorder 2, %s12
      // Predicated region
      $region37: #{tpu_custom_call.1} parent=5 // pred_check
        %p368 = pneg %p367
      $region38: #{tpu_custom_call.1} parent=5 // pred_check_branch
        %370 = sbr.rel (%p368) target = $region40
      $region39: #{tpu_custom_call.1} parent=5 // pred_region
        %s371 = ssub.s32 %s12, 2
        // Predicated region
        $region41: #{tpu_custom_call.1} parent=39 // pred_check
          %p372 = pneg %p88
        $region42: #{tpu_custom_call.1} parent=39 // pred_check_branch
          %374 = sbr.rel (%p372) target = $region44
        $region43: #{tpu_custom_call.1} parent=39 // pred_region
          %s375 = sand.u32 %s73, 1
          %s376 = scalar_lea.sflag [#allocation3], %s375
          %s377 = sand.u32 %s73, 1
          %s378 = scalar_lea.vmem [#allocation5], %s377
          %379 = dma.done %s376, 16
        $region44: #{tpu_custom_call.1} parent=39 // pred_fallthru
          _
      $region40: #{tpu_custom_call.1} parent=5 // pred_fallthru
        _
    $region6: #{tpu_custom_call.1} parent=1 // loop_footer
      %s16 = sadd.s32 1, %s12
    $region7: #{tpu_custom_call.1} parent=1 // loop_footer_branch
      %11 = sbr.rel target = $region3
    $region8: #{tpu_custom_call.1} parent=1 // loop_exit
      _
    %380 = vsyncpa [#allocation3], 1
    %s381 = scalar_lea.sflag [#allocation3], 1
    %382 = vsyncpa %s381, 1
    %383 = vsyncpa [#allocation4], 1
    %s384 = scalar_lea.sflag [#allocation4], 1
    %385 = vsyncpa %s384, 1

</llo_original>
